<compile_context>
chip_gen: v7x
topology: tpu7x:2x2x1
jax: 0.10.0
libtpu: 0.0.40
codegen_flags: <defaults>
</compile_context>

<pallas_src>
import jax
import jax.numpy as jnp
from jax.experimental import pallas as pl
from jax.experimental.pallas import tpu as pltpu


def adv_net_kernel(xT_ref, w1_ref, b1_ref, w2_ref, b2_ref, w3_ref, b3_ref, y_ref):
    # ad_layer1 + ReLU (dropout1 == identity at inference): MXU, f32 accumulate.
    h = jnp.dot(w1_ref[...], xT_ref[...], preferred_element_type=jnp.float32)
    h = jnp.maximum(h + b1_ref[...], 0.0)                          # (H, tile_b)
    # ad_layer2 + ReLU (dropout2 == identity at inference).
    h = jnp.dot(w2_ref[...], h.astype(w2_ref.dtype),
                preferred_element_type=jnp.float32)
    h = jnp.maximum(h + b2_ref[...], 0.0)                          # (H, tile_b)
    # ad_layer3 (out_features == 1) + sigmoid.  An N=1 matmul would waste
    # 127/255 MXU lanes, so use a VPU multiply + sublane reduce; the result is
    # already laid out along lanes -> lane-dense (1, tile_b) store.
    z = jnp.sum(h * w3_ref[...], axis=0, keepdims=True) + b3_ref[...]
    y_ref[...] = jax.nn.sigmoid(z)


def _num_tensorcores():
    # v7x has 2 TensorCores per chip; v5e/v6e have 1.
    try:
        return 2 if "v7" in jax.devices()[0].device_kind.lower() else 1
    except Exception:
        return 1


def _pick_tile_b(batch, n_tc):
    """Pick the biggest lane-dense batch tile.

    Cover the whole batch in as few sequential grid steps as possible; on a
    2-TC chip split into (at least) two tiles so the 'parallel' axis gives both
    cores work — but only when the tile stays a multiple of 128 lanes so the
    BlockSpec stays legal and stores stay unmasked.
    """
    tile = batch
    if n_tc > 1 and batch % n_tc == 0 and (batch // n_tc) % 128 == 0:
        tile = batch // n_tc
    # Cap very large batches to bound the per-step VMEM working set.
    if tile > 2048:
        for cand in (2048, 1024, 512, 256, 128):
            if tile % cand == 0:
                tile = cand
                break
    return tile


def sc_adversarial_network(x, params, reverse=True, tile_b=None,
                           mxu_dtype=jnp.bfloat16):
    """Forward pass.  `reverse` only affects gradients (GRL) — forward no-op."""
    del reverse
    B, F = x.shape
    H = params["w1"].shape[0]

    if tile_b is None:
        tile_b = _pick_tile_b(B, _num_tensorcores())
    assert B % tile_b == 0, (B, tile_b)
    n_tiles = B // tile_b

    # Layout plumbing (cheap wrapper-side XLA ops): batch -> lane axis, MXU
    # inputs -> bf16.  In real deployments the weights would be stored in bf16
    # once instead of being cast per call.
    xT = x.T.astype(mxu_dtype)                       # (F, B)
    w1 = params["w1"].astype(mxu_dtype)              # (H, F)
    w2 = params["w2"].astype(mxu_dtype)              # (H, H)
    b1, b2 = params["b1"], params["b2"]              # (H, 1) f32
    w3, b3 = params["w3"], params["b3"]              # (H, 1), (1, 1) f32

    isz = jnp.dtype(mxu_dtype).itemsize
    cost = pl.CostEstimate(
        flops=2 * B * (F * H + H * H + H),
        transcendentals=B,                           # one sigmoid per sample
        bytes_accessed=(B * F + H * F + H * H) * isz + (3 * H + 1 + B) * 4,
    )

    yT = pl.pallas_call(
        adv_net_kernel,
        out_shape=jax.ShapeDtypeStruct((1, B), jnp.float32),
        grid=(n_tiles,),
        in_specs=[
            pl.BlockSpec((F, tile_b), lambda i: (0, i)),   # x^T tile, batch on lanes
            # Grid-invariant blocks below (always (0,0)): per-step refetch elided.
            pl.BlockSpec((H, F), lambda i: (0, 0)),        # W1
            pl.BlockSpec((H, 1), lambda i: (0, 0)),        # b1 (column)
            pl.BlockSpec((H, H), lambda i: (0, 0)),        # W2
            pl.BlockSpec((H, 1), lambda i: (0, 0)),        # b2 (column)
            pl.BlockSpec((H, 1), lambda i: (0, 0)),        # W3 stored as column
            pl.BlockSpec((1, 1), lambda i: (0, 0)),        # b3
        ],
        out_specs=pl.BlockSpec((1, tile_b), lambda i: (0, i)),  # lane-dense output
        compiler_params=pltpu.CompilerParams(
            dimension_semantics=("parallel",)),
        cost_estimate=cost,
    )(xT, w1, b1, w2, b2, w3, b3)

    return yT.T                                      # (B, 1), PyTorch output shape


def init_params(key, in_feature, hidden_size):
    # Mirrors init_weights: xavier_normal_ on Linear weights, zeros on biases.
    # Weights in PyTorch-native (out, in) layout; W3 stored as a column (H, 1).
    k1, k2, k3 = jax.random.split(key, 3)

    def xavier_normal(k, fan_in, fan_out, shape):
        std = (2.0 / (fan_in + fan_out)) ** 0.5
        return std * jax.random.normal(k, shape, dtype=jnp.float32)

    return {
        "w1": xavier_normal(k1, in_feature, hidden_size, (hidden_size, in_feature)),
        "b1": jnp.zeros((hidden_size, 1), jnp.float32),
        "w2": xavier_normal(k2, hidden_size, hidden_size, (hidden_size, hidden_size)),
        "b2": jnp.zeros((hidden_size, 1), jnp.float32),
        "w3": xavier_normal(k3, hidden_size, 1, (hidden_size, 1)),
        "b3": jnp.zeros((1, 1), jnp.float32),
    }


def reference_forward(x, p):
    h = jnp.maximum(x @ p["w1"].T + p["b1"].T, 0.0)
    h = jnp.maximum(h @ p["w2"].T + p["b2"].T, 0.0)
    return jax.nn.sigmoid(h @ p["w3"] + p["b3"])


if __name__ == "__main__":
    B, IN_FEATURE, HIDDEN = 16, 64, 32

    key = jax.random.PRNGKey(0)
    kx, kp = jax.random.split(key)
    x = jax.random.normal(kx, (B, IN_FEATURE), dtype=jnp.float32)
    params = init_params(kp, IN_FEATURE, HIDDEN)

    y_ref = reference_forward(x, params)

    # Exact-math mode (f32 MXU inputs) — tight check.
    y_f32 = jax.block_until_ready(
        sc_adversarial_network(x, params, reverse=True, mxu_dtype=jnp.float32))
    assert y_f32.shape == (B, 1)
    assert jnp.allclose(y_f32, y_ref, atol=1e-4, rtol=1e-4)

    # Performance mode (bf16 MXU inputs, f32 accumulation) — loose check.
    y_bf16 = jax.block_until_ready(
        sc_adversarial_network(x, params, reverse=True))
    assert y_bf16.shape == (B, 1)
    assert jnp.allclose(y_bf16, y_ref, atol=3e-2, rtol=3e-2)

    print("KERNEL_OK")
</pallas_src>

<mosaic_0001>
module attributes {stable_mosaic.version = 11 : i64} {
  func.func @adv_net_kernel(%arg0: i32, %arg1: memref<64x16xf32, #tpu.memory_space<vmem>>, %arg2: memref<32x64xf32, #tpu.memory_space<vmem>>, %arg3: memref<32x1xf32, #tpu.memory_space<vmem>>, %arg4: memref<32x32xf32, #tpu.memory_space<vmem>>, %arg5: memref<32x1xf32, #tpu.memory_space<vmem>>, %arg6: memref<32x1xf32, #tpu.memory_space<vmem>>, %arg7: memref<1x1xf32, #tpu.memory_space<vmem>>, %arg8: memref<1x16xf32, #tpu.memory_space<vmem>>) attributes {dimension_semantics = [#tpu.dimension_semantics<parallel>], iteration_bounds = array<i64: 1>, scalar_prefetch = 0 : i64, scratch_operands = 0 : i64, tpu.core_type = #tpu.core_type<tc>, window_params = [{transform_indices = @transform_0, window_bounds = array<i64: 64, 16>}, {pipeline_mode = #tpu.pipeline_mode<synchronous>, transform_indices = @transform_1, window_bounds = array<i64: 32, 64>}, {pipeline_mode = #tpu.pipeline_mode<synchronous>, transform_indices = @transform_2, window_bounds = array<i64: 32, 1>}, {pipeline_mode = #tpu.pipeline_mode<synchronous>, transform_indices = @transform_3, window_bounds = array<i64: 32, 32>}, {pipeline_mode = #tpu.pipeline_mode<synchronous>, transform_indices = @transform_4, window_bounds = array<i64: 32, 1>}, {pipeline_mode = #tpu.pipeline_mode<synchronous>, transform_indices = @transform_5, window_bounds = array<i64: 32, 1>}, {pipeline_mode = #tpu.pipeline_mode<synchronous>, transform_indices = @transform_6, window_bounds = array<i64: 1, 1>}, {transform_indices = @transform_7, window_bounds = array<i64: 1, 16>}]} {
    %c0 = arith.constant 0 : index
    %c0_0 = arith.constant 0 : index
    %0 = vector.load %arg2[%c0, %c0_0] : memref<32x64xf32, #tpu.memory_space<vmem>>, vector<32x64xf32>
    %c0_1 = arith.constant 0 : index
    %c0_2 = arith.constant 0 : index
    %1 = vector.load %arg1[%c0_1, %c0_2] : memref<64x16xf32, #tpu.memory_space<vmem>>, vector<64x16xf32>
    %cst = arith.constant dense<0.000000e+00> : vector<32x16xf32>
    %2 = tpu.matmul %0, %1, %cst {dimension_numbers = #tpu.dot_dimension_numbers<[1], [0], [0], [1], [0, 0, 1, 1], [], []>} : vector<32x64xf32>, vector<64x16xf32>, vector<32x16xf32> -> vector<32x16xf32>
    %c0_3 = arith.constant 0 : index
    %c0_4 = arith.constant 0 : index
    %3 = vector.load %arg3[%c0_3, %c0_4] : memref<32x1xf32, #tpu.memory_space<vmem>>, vector<32x1xf32>
    %4 = vector.broadcast %3 : vector<32x1xf32> to vector<32x16xf32>
    %5 = arith.addf %2, %4 : vector<32x16xf32>
    %cst_5 = arith.constant 0.000000e+00 : f32
    %6 = vector.broadcast %cst_5 : f32 to vector<32x16xf32>
    %7 = arith.maximumf %5, %6 : vector<32x16xf32>
    %c0_6 = arith.constant 0 : index
    %c0_7 = arith.constant 0 : index
    %8 = vector.load %arg4[%c0_6, %c0_7] : memref<32x32xf32, #tpu.memory_space<vmem>>, vector<32x32xf32>
    %cst_8 = arith.constant dense<0.000000e+00> : vector<32x16xf32>
    %9 = tpu.matmul %8, %7, %cst_8 {dimension_numbers = #tpu.dot_dimension_numbers<[1], [0], [0], [1], [0, 0, 1, 1], [], []>} : vector<32x32xf32>, vector<32x16xf32>, vector<32x16xf32> -> vector<32x16xf32>
    %c0_9 = arith.constant 0 : index
    %c0_10 = arith.constant 0 : index
    %10 = vector.load %arg5[%c0_9, %c0_10] : memref<32x1xf32, #tpu.memory_space<vmem>>, vector<32x1xf32>
    %11 = vector.broadcast %10 : vector<32x1xf32> to vector<32x16xf32>
    %12 = arith.addf %9, %11 : vector<32x16xf32>
    %cst_11 = arith.constant 0.000000e+00 : f32
    %13 = vector.broadcast %cst_11 : f32 to vector<32x16xf32>
    %14 = arith.maximumf %12, %13 : vector<32x16xf32>
    %c0_12 = arith.constant 0 : index
    %c0_13 = arith.constant 0 : index
    %15 = vector.load %arg6[%c0_12, %c0_13] : memref<32x1xf32, #tpu.memory_space<vmem>>, vector<32x1xf32>
    %16 = vector.broadcast %15 : vector<32x1xf32> to vector<32x16xf32>
    %17 = arith.mulf %14, %16 : vector<32x16xf32>
    %cst_14 = arith.constant dense<0.000000e+00> : vector<16xf32>
    %18 = vector.multi_reduction <add>, %17, %cst_14 [0] : vector<32x16xf32> to vector<16xf32>
    %19 = vector.shape_cast %18 : vector<16xf32> to vector<1x16xf32>
    %c0_15 = arith.constant 0 : index
    %c0_16 = arith.constant 0 : index
    %20 = vector.load %arg7[%c0_15, %c0_16] : memref<1x1xf32, #tpu.memory_space<vmem>>, vector<1x1xf32>
    %21 = vector.broadcast %20 : vector<1x1xf32> to vector<1x16xf32>
    %22 = arith.addf %19, %21 : vector<1x16xf32>
    %23 = arith.negf %22 : vector<1x16xf32>
    %24 = math.exp %23 : vector<1x16xf32>
    %cst_17 = arith.constant 1.000000e+00 : f32
    %25 = vector.broadcast %cst_17 : f32 to vector<1x16xf32>
    %26 = arith.addf %25, %24 : vector<1x16xf32>
    %27 = arith.divf %25, %26 : vector<1x16xf32>
    %c0_18 = arith.constant 0 : index
    %c0_19 = arith.constant 0 : index
    %28 = vector.load %arg8[%c0_18, %c0_19] : memref<1x16xf32, #tpu.memory_space<vmem>>, vector<1x16xf32>
    tpu.vector_store %arg8[%c0_18, %c0_19], %27 {strides = array<i32>} : memref<1x16xf32, #tpu.memory_space<vmem>>, vector<1x16xf32>,
    return
  }
  func.func @transform_0(%arg0: i32) -> (i32, i32) {
    %c0_i32 = arith.constant 0 : i32
    %c0_i32_0 = arith.constant 0 : i32
    return %c0_i32, %arg0 : i32, i32
  }
  func.func @transform_1(%arg0: i32) -> (i32, i32) {
    %c0_i32 = arith.constant 0 : i32
    %c0_i32_0 = arith.constant 0 : i32
    %c0_i32_1 = arith.constant 0 : i32
    return %c0_i32, %c0_i32_0 : i32, i32
  }
  func.func @transform_2(%arg0: i32) -> (i32, i32) {
    %c0_i32 = arith.constant 0 : i32
    %c0_i32_0 = arith.constant 0 : i32
    %c0_i32_1 = arith.constant 0 : i32
    return %c0_i32, %c0_i32_0 : i32, i32
  }
  func.func @transform_3(%arg0: i32) -> (i32, i32) {
    %c0_i32 = arith.constant 0 : i32
    %c0_i32_0 = arith.constant 0 : i32
    %c0_i32_1 = arith.constant 0 : i32
    return %c0_i32, %c0_i32_0 : i32, i32
  }
  func.func @transform_4(%arg0: i32) -> (i32, i32) {
    %c0_i32 = arith.constant 0 : i32
    %c0_i32_0 = arith.constant 0 : i32
    %c0_i32_1 = arith.constant 0 : i32
    return %c0_i32, %c0_i32_0 : i32, i32
  }
  func.func @transform_5(%arg0: i32) -> (i32, i32) {
    %c0_i32 = arith.constant 0 : i32
    %c0_i32_0 = arith.constant 0 : i32
    %c0_i32_1 = arith.constant 0 : i32
    return %c0_i32, %c0_i32_0 : i32, i32
  }
  func.func @transform_6(%arg0: i32) -> (i32, i32) {
    %c0_i32 = arith.constant 0 : i32
    %c0_i32_0 = arith.constant 0 : i32
    %c0_i32_1 = arith.constant 0 : i32
    return %c0_i32, %c0_i32_0 : i32, i32
  }
  func.func @transform_7(%arg0: i32) -> (i32, i32) {
    %c0_i32 = arith.constant 0 : i32
    %c0_i32_0 = arith.constant 0 : i32
    return %c0_i32, %arg0 : i32, i32
  }
}

</mosaic_0001>

<llo_original>
// kernel: tpu_custom_call.1
$region0: #{tpu_custom_call.1}
  #allocation0 [shape = 'u32[]', space=smem, size = 0x4, offset = 0x4, fixed_abs, tag = 'smem constant byte address 0x4 - core index']
  #allocation1 [shape = 'u32[144,128]{1,0:T(1,128)}', space=vmem, size = 0x12000, scoped, tag = 'internal scratch']
  #allocation2 [shape = 'f32[1,1]{1,0:T(1,128)S(1)}', space=vmem, size = 0x200, scoped, tag = 'scoped memory for tpu_custom_call.1']
  %s0 = inlined_call_operand.vmem [shape: f32[64,16], index: 0, kind: input, shape index: {}]
  %s1 = inlined_call_operand.vmem [shape: f32[32,64], index: 1, kind: input, shape index: {}]
  %s2 = inlined_call_operand.vmem [shape: f32[32,1], index: 2, kind: input, shape index: {}]
  %s3 = inlined_call_operand.vmem [shape: f32[32,32], index: 3, kind: input, shape index: {}]
  %s4 = inlined_call_operand.vmem [shape: f32[32,1], index: 4, kind: input, shape index: {}]
  %s5 = inlined_call_operand.vmem [shape: f32[32,1], index: 5, kind: input, shape index: {}]
  %s6 = inlined_call_operand.<no memory space> [shape: f32[1,1], index: 6, kind: input, shape index: {}]
  %s7 = inlined_call_operand.hbm [shape: f32[1,16], index: 7, kind: output, shape index: {}]
  %s8 = sld [smem:[#allocation0]]
  $region38: #{tpu_custom_call.1} parent=0
    _
  %s10 = ssub.s32 1, %s8
  %s11 = scalar_select 0, %s10, %s8
  %v12 = vstv %s6
  %13 = vst [vmem:[#allocation2] sm:$0x1] %v12
  $region1: #{tpu_custom_call.1} parent=0
    #allocation3 [shape = 'u8[512]{0}', space=vmem, size = 0x400, scoped, tag = 'output window, operand 0, single buffered']
    #allocation4 [shape = 's32[1]{0}', space=sflag, size = 0x4, scoped, tag = 'scoped memory for tpu_custom_call.1']
    %14 = vsyncpa [#allocation4], 0
    // Predicated region
    $region2: #{tpu_custom_call.1} parent=1 // pred_check
      _
    $region3: #{tpu_custom_call.1} parent=1 // pred_check_branch
      %16 = sbr.rel (0) target = $region5
    $region4: #{tpu_custom_call.1} parent=1 // pred_region
      _
    $region5: #{tpu_custom_call.1} parent=1 // pred_fallthru
      _
    // Predicated region
    $region6: #{tpu_custom_call.1} parent=1 // pred_check
      _
    $region7: #{tpu_custom_call.1} parent=1 // pred_check_branch
      %18 = sbr.rel (0) target = $region9
    $region8: #{tpu_custom_call.1} parent=1 // pred_region
      _
    $region9: #{tpu_custom_call.1} parent=1 // pred_fallthru
      _
    // Predicated region
    $region10: #{tpu_custom_call.1} parent=1 // pred_check
      _
    $region11: #{tpu_custom_call.1} parent=1 // pred_check_branch
      %20 = sbr.rel (0) target = $region13
    $region12: #{tpu_custom_call.1} parent=1 // pred_region
      _
    $region13: #{tpu_custom_call.1} parent=1 // pred_fallthru
      _
    // Predicated region
    $region14: #{tpu_custom_call.1} parent=1 // pred_check
      _
    $region15: #{tpu_custom_call.1} parent=1 // pred_check_branch
      %22 = sbr.rel (0) target = $region17
    $region16: #{tpu_custom_call.1} parent=1 // pred_region
      _
    $region17: #{tpu_custom_call.1} parent=1 // pred_fallthru
      _
    // Predicated region
    $region18: #{tpu_custom_call.1} parent=1 // pred_check
      _
    $region19: #{tpu_custom_call.1} parent=1 // pred_check_branch
      %24 = sbr.rel (0) target = $region21
    $region20: #{tpu_custom_call.1} parent=1 // pred_region
      _
    $region21: #{tpu_custom_call.1} parent=1 // pred_fallthru
      _
    // Predicated region
    $region22: #{tpu_custom_call.1} parent=1 // pred_check
      _
    $region23: #{tpu_custom_call.1} parent=1 // pred_check_branch
      %26 = sbr.rel (0) target = $region25
    $region24: #{tpu_custom_call.1} parent=1 // pred_region
      _
    $region25: #{tpu_custom_call.1} parent=1 // pred_fallthru
      _
    // Predicated region
    $region26: #{tpu_custom_call.1} parent=1 // pred_check
      _
    $region27: #{tpu_custom_call.1} parent=1 // pred_check_branch
      %28 = sbr.rel (0) target = $region29
    $region28: #{tpu_custom_call.1} parent=1 // pred_region
      _
    $region29: #{tpu_custom_call.1} parent=1 // pred_fallthru
      _
    %v29 = vld [vmem:[%s1] sm:$0xff]
    %v30 = vld [vmem:[%s1 + $0x8] sm:$0xff]
    %v31 = vld [vmem:[%s1 + $0x10] sm:$0xff]
    %v32 = vld [vmem:[%s1 + $0x18] sm:$0xff]
    %v33 = vld [vmem:[%s0] sm:$0xff]
    %v34 = vld [vmem:[%s0 + $0x8] sm:$0xff]
    %v35 = vld [vmem:[%s0 + $0x10] sm:$0xff]
    %v36 = vld [vmem:[%s0 + $0x18] sm:$0xff]
    %v37 = vld [vmem:[%s0 + $0x20] sm:$0xff]
    %v38 = vld [vmem:[%s0 + $0x28] sm:$0xff]
    %v39 = vld [vmem:[%s0 + $0x30] sm:$0xff]
    %v40 = vld [vmem:[%s0 + $0x38] sm:$0xff]
    %v41 = vld [vmem:[%s2] sm:$0xff]
    %v42 = vld [vmem:[%s2 + $0x8] sm:$0xff]
    %v43 = vld [vmem:[%s2 + $0x10] sm:$0xff]
    %v44 = vld [vmem:[%s2 + $0x18] sm:$0xff]
    %46 = vset.pattern.permute.xlu0 0
    %47 = vperm.xlu0 %46, %v41
    %v48 = vpop.permute.xlu0 %47
    %51 = vset.pattern.permute.xlu0 0
    %52 = vperm.xlu0 %51, %v42
    %v53 = vpop.permute.xlu0 %52
    %56 = vset.pattern.permute.xlu0 0
    %57 = vperm.xlu0 %56, %v43
    %v58 = vpop.permute.xlu0 %57
    %61 = vset.pattern.permute.xlu0 0
    %62 = vperm.xlu0 %61, %v44
    %v63 = vpop.permute.xlu0 %62
    %vm65 = vcmask 523264
    %v67 = vsel %vm65, %v29, 0
    %v70 = vsel %vm65, %v30, 0
    %v73 = vsel %vm65, %v31, 0
    %v76 = vsel %vm65, %v32, 0
    %78 = vmatprep.subr.mxu0 0.0
    %79 = vmatpush1.msra.mxu0 %v33
    %80 = vmatprep.subr.mxu0 0.0
    %81 = vmatpush1.msra.mxu0 %v34
    %82 = vmatprep.subr.mxu0 0.0
    %83 = vmatpush1.msra.mxu0 %v35
    %84 = vmatprep.subr.mxu0 0.0
    %85 = vmatpush1.msra.mxu0 %v36
    %86 = vmatprep.subr.mxu0 0.0
    %87 = vmatpush1.msra.mxu0 %v37
    %88 = vmatprep.subr.mxu0 0.0
    %89 = vmatpush1.msra.mxu0 %v38
    %90 = vmatprep.subr.mxu0 0.0
    %91 = vmatpush1.msra.mxu0 %v39
    %92 = vmatprep.subr.mxu0 0.0
    %93 = vmatpush1.msra.mxu0 %v40
    %94 = vmatprep.subr.mxu0 0.0
    %95 = vmatpush1.msra.mxu0 0.0
    %96 = vmatprep.subr.mxu0 0.0
    %97 = vmatpush1.msra.mxu0 0.0
    %98 = vmatprep.subr.mxu0 0.0
    %99 = vmatpush1.msra.mxu0 0.0
    %100 = vmatprep.subr.mxu0 0.0
    %101 = vmatpush1.msra.mxu0 0.0
    %102 = vmatprep.subr.mxu0 0.0
    %103 = vmatpush1.msra.mxu0 0.0
    %104 = vmatprep.subr.mxu0 0.0
    %105 = vmatpush1.msra.mxu0 0.0
    %106 = vmatprep.subr.mxu0 0.0
    %107 = vmatpush1.msra.mxu0 0.0
    %108 = vmatprep.subr.mxu0 0.0
    %109 = vmatpush1.msra.mxu0 0.0
    %110 = vmatprep.subr.mxu0 0.0
    %111 = vmatpush1.msra.mxu0 0.0
    %112 = vmatprep.subr.mxu0 0.0
    %113 = vmatpush1.msra.mxu0 0.0
    %114 = vmatprep.subr.mxu0 0.0
    %115 = vmatpush1.msra.mxu0 0.0
    %116 = vmatprep.subr.mxu0 0.0
    %117 = vmatpush1.msra.mxu0 0.0
    %118 = vmatprep.subr.mxu0 0.0
    %119 = vmatpush1.msra.mxu0 0.0
    %120 = vmatprep.subr.mxu0 0.0
    %121 = vmatpush1.msra.mxu0 0.0
    %122 = vmatprep.subr.mxu0 0.0
    %123 = vmatpush1.msra.mxu0 0.0
    %124 = vmatprep.subr.mxu0 0.0
    %125 = vmatpush1.msra.mxu0 0.0
    %126 = vmatprep.subr.mxu0 0.0
    %127 = vmatpush1.msra.mxu0 0.0
    %128 = vmatprep.subr.mxu0 0.0
    %129 = vmatpush1.msra.mxu0 0.0
    %130 = vmatprep.subr.mxu0 0.0
    %131 = vmatpush1.msra.mxu0 0.0
    %132 = vmatprep.subr.mxu0 0.0
    %133 = vmatpush1.msra.mxu0 0.0
    %134 = vmatprep.subr.mxu0 0.0
    %135 = vmatpush1.msra.mxu0 0.0
    %136 = vmatprep.subr.mxu0 0.0
    %137 = vmatpush1.msra.mxu0 0.0
    %138 = vmatprep.subr.mxu0 0.0
    %139 = vmatpush1.msra.mxu0 0.0
    %140 = vmatprep.subr.mxu0 0.0
    %141 = vmatpush1.msra.mxu0 0.0
    %142 = vmatprep.mubr.f32.mxu0 0.0
    %143 = vmatmul.mubr.f32.gmra.mrb[0].mxu0 %v67
    %v144 = vpop.f32.mrb[0].mxu0
    %v145 = vadd.f32 %v48, %v144
    %v146 = vpop.f32.mrb[0].mxu0
    %147 = vmatprep.mubr.f32.mxu0 0.0
    %148 = vmatmul.mubr.f32.gmra.mrb[0].mxu0 %v70
    %v149 = vpop.f32.mrb[0].mxu0
    %v150 = vadd.f32 %v53, %v149
    %v151 = vpop.f32.mrb[0].mxu0
    %152 = vmatprep.mubr.f32.mxu0 0.0
    %153 = vmatmul.mubr.f32.gmra.mrb[0].mxu0 %v73
    %v154 = vpop.f32.mrb[0].mxu0
    %v155 = vadd.f32 %v58, %v154
    %v156 = vpop.f32.mrb[0].mxu0
    %157 = vmatprep.mubr.f32.mxu0 0.0
    %158 = vmatmul.mubr.f32.gmra.mrb[0].mxu0 %v76
    %v159 = vpop.f32.mrb[0].mxu0
    %v160 = vadd.f32 %v63, %v159
    %v161 = vpop.f32.mrb[0].mxu0
    %162 = vdwg.mxu0
    %v163 = vmax.f32 %v145, 0.0
    %v164 = vmax.f32 %v150, 0.0
    %v165 = vmax.f32 %v155, 0.0
    %v166 = vmax.f32 %v160, 0.0
    %v167 = vld [vmem:[%s3] sm:$0xff]
    %v168 = vld [vmem:[%s3 + $0x8] sm:$0xff]
    %v169 = vld [vmem:[%s3 + $0x10] sm:$0xff]
    %v170 = vld [vmem:[%s3 + $0x18] sm:$0xff]
    %v171 = vld [vmem:[%s4] sm:$0xff]
    %v172 = vld [vmem:[%s4 + $0x8] sm:$0xff]
    %v173 = vld [vmem:[%s4 + $0x10] sm:$0xff]
    %v174 = vld [vmem:[%s4 + $0x18] sm:$0xff]
    %176 = vset.pattern.permute.xlu0 0
    %177 = vperm.xlu0 %176, %v171
    %v178 = vpop.permute.xlu0 %177
    %181 = vset.pattern.permute.xlu0 0
    %182 = vperm.xlu0 %181, %v172
    %v183 = vpop.permute.xlu0 %182
    %186 = vset.pattern.permute.xlu0 0
    %187 = vperm.xlu0 %186, %v173
    %v188 = vpop.permute.xlu0 %187
    %191 = vset.pattern.permute.xlu0 0
    %192 = vperm.xlu0 %191, %v174
    %v193 = vpop.permute.xlu0 %192
    %vm195 = vcmask 261120
    %v197 = vsel %vm195, %v167, 0
    %v200 = vsel %vm195, %v168, 0
    %v203 = vsel %vm195, %v169, 0
    %v206 = vsel %vm195, %v170, 0
    %208 = vmatprep.subr.mxu0 0.0
    %209 = vmatpush1.msra.mxu0 %v163
    %210 = vmatprep.subr.mxu0 0.0
    %211 = vmatpush1.msra.mxu0 %v164
    %212 = vmatprep.subr.mxu0 0.0
    %213 = vmatpush1.msra.mxu0 %v165
    %214 = vmatprep.subr.mxu0 0.0
    %215 = vmatpush1.msra.mxu0 %v166
    %216 = vmatprep.subr.mxu0 0.0
    %217 = vmatpush1.msra.mxu0 0.0
    %218 = vmatprep.subr.mxu0 0.0
    %219 = vmatpush1.msra.mxu0 0.0
    %220 = vmatprep.subr.mxu0 0.0
    %221 = vmatpush1.msra.mxu0 0.0
    %222 = vmatprep.subr.mxu0 0.0
    %223 = vmatpush1.msra.mxu0 0.0
    %224 = vmatprep.subr.mxu0 0.0
    %225 = vmatpush1.msra.mxu0 0.0
    %226 = vmatprep.subr.mxu0 0.0
    %227 = vmatpush1.msra.mxu0 0.0
    %228 = vmatprep.subr.mxu0 0.0
    %229 = vmatpush1.msra.mxu0 0.0
    %230 = vmatprep.subr.mxu0 0.0
    %231 = vmatpush1.msra.mxu0 0.0
    %232 = vmatprep.subr.mxu0 0.0
    %233 = vmatpush1.msra.mxu0 0.0
    %234 = vmatprep.subr.mxu0 0.0
    %235 = vmatpush1.msra.mxu0 0.0
    %236 = vmatprep.subr.mxu0 0.0
    %237 = vmatpush1.msra.mxu0 0.0
    %238 = vmatprep.subr.mxu0 0.0
    %239 = vmatpush1.msra.mxu0 0.0
    %240 = vmatprep.subr.mxu0 0.0
    %241 = vmatpush1.msra.mxu0 0.0
    %242 = vmatprep.subr.mxu0 0.0
    %243 = vmatpush1.msra.mxu0 0.0
    %244 = vmatprep.subr.mxu0 0.0
    %245 = vmatpush1.msra.mxu0 0.0
    %246 = vmatprep.subr.mxu0 0.0
    %247 = vmatpush1.msra.mxu0 0.0
    %248 = vmatprep.subr.mxu0 0.0
    %249 = vmatpush1.msra.mxu0 0.0
    %250 = vmatprep.subr.mxu0 0.0
    %251 = vmatpush1.msra.mxu0 0.0
    %252 = vmatprep.subr.mxu0 0.0
    %253 = vmatpush1.msra.mxu0 0.0
    %254 = vmatprep.subr.mxu0 0.0
    %255 = vmatpush1.msra.mxu0 0.0
    %256 = vmatprep.subr.mxu0 0.0
    %257 = vmatpush1.msra.mxu0 0.0
    %258 = vmatprep.subr.mxu0 0.0
    %259 = vmatpush1.msra.mxu0 0.0
    %260 = vmatprep.subr.mxu0 0.0
    %261 = vmatpush1.msra.mxu0 0.0
    %262 = vmatprep.subr.mxu0 0.0
    %263 = vmatpush1.msra.mxu0 0.0
    %264 = vmatprep.subr.mxu0 0.0
    %265 = vmatpush1.msra.mxu0 0.0
    %266 = vmatprep.subr.mxu0 0.0
    %267 = vmatpush1.msra.mxu0 0.0
    %268 = vmatprep.subr.mxu0 0.0
    %269 = vmatpush1.msra.mxu0 0.0
    %270 = vmatprep.subr.mxu0 0.0
    %271 = vmatpush1.msra.mxu0 0.0
    %272 = vmatprep.mubr.f32.mxu0 0.0
    %273 = vmatmul.mubr.f32.gmra.mrb[0].mxu0 %v197
    %v274 = vpop.f32.mrb[0].mxu0
    %v275 = vadd.f32 %v178, %v274
    %v276 = vpop.f32.mrb[0].mxu0
    %277 = vmatprep.mubr.f32.mxu0 0.0
    %278 = vmatmul.mubr.f32.gmra.mrb[0].mxu0 %v200
    %v279 = vpop.f32.mrb[0].mxu0
    %v280 = vadd.f32 %v183, %v279
    %v281 = vpop.f32.mrb[0].mxu0
    %282 = vmatprep.mubr.f32.mxu0 0.0
    %283 = vmatmul.mubr.f32.gmra.mrb[0].mxu0 %v203
    %v284 = vpop.f32.mrb[0].mxu0
    %v285 = vadd.f32 %v188, %v284
    %v286 = vpop.f32.mrb[0].mxu0
    %287 = vmatprep.mubr.f32.mxu0 0.0
    %288 = vmatmul.mubr.f32.gmra.mrb[0].mxu0 %v206
    %v289 = vpop.f32.mrb[0].mxu0
    %v290 = vadd.f32 %v193, %v289
    %v291 = vpop.f32.mrb[0].mxu0
    %292 = vdwg.mxu0
    %v293 = vmax.f32 %v275, 0.0
    %v294 = vmax.f32 %v280, 0.0
    %v295 = vmax.f32 %v285, 0.0
    %v296 = vmax.f32 %v290, 0.0
    %v297 = vld [vmem:[%s5] sm:$0xff]
    %v298 = vld [vmem:[%s5 + $0x8] sm:$0xff]
    %v299 = vld [vmem:[%s5 + $0x10] sm:$0xff]
    %v300 = vld [vmem:[%s5 + $0x18] sm:$0xff]
    %302 = vset.pattern.permute.xlu0 0
    %303 = vperm.xlu0 %302, %v297
    %v304 = vpop.permute.xlu0 %303
    %307 = vset.pattern.permute.xlu0 0
    %308 = vperm.xlu0 %307, %v298
    %v309 = vpop.permute.xlu0 %308
    %312 = vset.pattern.permute.xlu0 0
    %313 = vperm.xlu0 %312, %v299
    %v314 = vpop.permute.xlu0 %313
    %317 = vset.pattern.permute.xlu0 0
    %318 = vperm.xlu0 %317, %v300
    %v319 = vpop.permute.xlu0 %318
    %v321 = vmul.f32 %v293, %v304
    %v322 = vmul.f32 %v294, %v309
    %v323 = vmul.f32 %v295, %v314
    %v324 = vmul.f32 %v296, %v319
    %vm325 = vcmask 130048
    %v326 = vsel %vm325, %v321, 0.0
    %v327 = vsel %vm325, %v322, 0.0
    %v328 = vadd.f32 %v326, %v327
    %v329 = vsel %vm325, %v323, 0.0
    %v330 = vadd.f32 %v328, %v329
    %v331 = vsel %vm325, %v324, 0.0
    %v332 = vadd.f32 %v330, %v331
    %v333 = vrot.slane %v332, 4
    %v334 = vadd.f32 %v332, %v333
    %v335 = vrot.slane %v334, 2
    %v336 = vadd.f32 %v334, %v335
    %v337 = vrot.slane %v336, 1
    %v338 = vadd.f32 %v336, %v337
    %v339 = vld [vmem:[#allocation2] sm:$0x1]
    %341 = vset.pattern.permute.xlu0 0
    %342 = vperm.xlu0 %341, %v339
    %v343 = vpop.permute.xlu0 %342
    %v345 = vlaneseq
    %v346 = vshrl.u32 %v345, 7
    %v347 = vsub.s32 0, %v346
    %v348 = vrot.slane %v343, %v347
    %v349 = vadd.f32 %v338, %v348
    %v350 = vxor.u32 %v349, 2147483648
    %v351 = vmul.f32 %v350, 1.442695
    %v352 = vpow.pop %v351
    %v353 = vadd.f32 %v352, 1.0
    %v354 = vrcp.pop %v353
    %v355 = vmul.f32 1.0, %v354
    %vm356 = vcmask 122880
    %357 = vst.msk [vmem:[#allocation3] sm:$0x1] %vm356, %v355
    // Predicated region
    $region30: #{tpu_custom_call.1} parent=1 // pred_check
      _
    $region31: #{tpu_custom_call.1} parent=1 // pred_check_branch
      %359 = sbr.rel (0) target = $region33
    $region32: #{tpu_custom_call.1} parent=1 // pred_region
      %s361 = ssub.s32 16, 16
      %362 = vsyncadd [#allocation4], %s361
      %s364 = sshll.u32 [#allocation3], 4
      %s365 = int_to_ptr.vmem [resolvable:$true] %s364
      %367 = dma.vmem_to_hbm [thread:$0]  %s365, 16, %s7, [#allocation4]
    $region33: #{tpu_custom_call.1} parent=1 // pred_fallthru
      _
    // Predicated region
    $region34: #{tpu_custom_call.1} parent=1 // pred_check
      _
    $region35: #{tpu_custom_call.1} parent=1 // pred_check_branch
      %369 = sbr.rel (0) target = $region37
    $region36: #{tpu_custom_call.1} parent=1 // pred_region
      %370 = dma.done [#allocation4], 16
    $region37: #{tpu_custom_call.1} parent=1 // pred_fallthru
      _
    %371 = vsyncpa [#allocation4], 1

</llo_original>
